<compile_context>
chip_gen: v5e
topology: v5e:2x2
jax: 0.10.0
libtpu: 0.0.40
codegen_flags: <defaults>
</compile_context>

<pallas_src>
import functools

import jax
import jax.numpy as jnp
import numpy as np
from jax import lax
from jax.experimental import pallas as pl
from jax.experimental.pallas import tpu as pltpu


# ----------------------------------------------------------------------------
# Fused Pallas kernel: all RNN layers + FC head in one call
# ----------------------------------------------------------------------------
def _fused_rnn_kernel(*refs, T, B, num_layers):
    """refs layout (all whole-array VMEM blocks):

      refs[0]                       x      (T*B, D)   time-major rows (row = t*B + b)
      refs[1+3i : 4+3i]             layer i: W_ih^T (Din,H), W_hh^T (H,H), bias (1,H)
      refs[1+3L] / refs[2+3L]       fc_w (H, O), fc_b (1, O)
      refs[3+3L]                    y      (T*B, O)   output
      refs[4+3L] / refs[5+3L]       scratch: U (T*B, H), hidden sequence (T*B, H)
    """
    x_ref = refs[0]
    layer_refs = [refs[1 + 3 * i: 4 + 3 * i] for i in range(num_layers)]
    fcw_ref = refs[1 + 3 * num_layers]
    fcb_ref = refs[2 + 3 * num_layers]
    y_ref = refs[3 + 3 * num_layers]
    u_ref = refs[4 + 3 * num_layers]      # hoisted input projection U
    hseq_ref = refs[5 + 3 * num_layers]   # per-layer hidden-state sequence

    H = u_ref.shape[-1]
    h0 = jnp.zeros((B, H), jnp.float32)

    cur = x_ref[...]                      # (T*B, D_in) current layer input sequence
    for wih_ref, whh_ref, b_ref in layer_refs:
        # Hoisted input-to-hidden projection + combined bias: ONE big MXU matmul
        # for the whole sequence. Only h @ W_hh carries a dependence across t.
        u_ref[...] = (
            jnp.dot(cur, wih_ref[...], preferred_element_type=jnp.float32)
            + b_ref[...]
        )
        whh_t = whh_ref[...]              # loop-invariant; pre-transposed in wrapper

        def step(t, h_prev, whh_t=whh_t):
            row = t * B
            u_t = u_ref[pl.ds(row, B), :]                       # (B, H), bias folded in
            h_new = jnp.tanh(                                   # tanh -> EUP (free slot)
                u_t + jnp.dot(h_prev, whh_t, preferred_element_type=jnp.float32)
            )
            hseq_ref[pl.ds(row, B), :] = h_new
            return h_new

        # Serial recurrence over time, fully unrolled (small fixed T) so the
        # scheduler can pipeline loads / matmuls / tanh across timesteps.
        lax.fori_loop(0, T, step, h0, unroll=True)
        cur = hseq_ref[...]               # feeds the next layer / the FC head

    # Fused FC head: one matmul over the full sequence, single output store.
    y_ref[...] = (
        jnp.dot(cur, fcw_ref[...], preferred_element_type=jnp.float32)
        + fcb_ref[...]
    )


# ----------------------------------------------------------------------------
# Wrapper
# ----------------------------------------------------------------------------
@jax.jit
def rnn_model_forward(x_btd, params):
    """Full forward pass matching RNN.forward (eval mode). x_btd: (B, T, D)."""
    B, T, D = x_btd.shape
    num_layers = len(params["rnn"])
    H = params["rnn"][0][0].shape[0]
    O = params["fc_w"].shape[1]

    # One-off XLA transpose to time-major rows (row index = t*B + b).
    x_flat = jnp.transpose(x_btd, (1, 0, 2)).reshape(T * B, D)

    inputs = [x_flat]
    for (w_ih, w_hh, b_ih, b_hh) in params["rnn"]:
        # Pre-transpose weights once (no per-timestep .T in the kernel) and fold
        # b_ih + b_hh into a single bias row added to the hoisted projection.
        inputs += [w_ih.T, w_hh.T, (b_ih + b_hh).reshape(1, H)]
    inputs += [params["fc_w"], params["fc_b"].reshape(1, O)]

    kernel = functools.partial(_fused_rnn_kernel, T=T, B=B, num_layers=num_layers)

    # Everything (activations + weights) is a few KB here, so a single fused
    # pallas_call with whole-array VMEM blocks (no grid) is the right regime.
    # TODO(synk): for large T*B this needs time-chunking against VMEM (64 MiB on v7x)
    # and batch sharding across v7x's two TensorCores.
    y_flat = pl.pallas_call(
        kernel,
        out_shape=jax.ShapeDtypeStruct((T * B, O), jnp.float32),
        scratch_shapes=[
            pltpu.VMEM((T * B, H), jnp.float32),   # U = X @ W_ih^T + bias
            pltpu.VMEM((T * B, H), jnp.float32),   # per-layer hidden sequence
        ],
    )(*inputs)

    # rows are t-major: (T*B, O) -> (T, B, O) -> batch-first (B, T, O)
    # result = out[:, encode_length:, :] with encode_length = 0 -> full sequence
    return y_flat.reshape(T, B, O).transpose(1, 0, 2)


# ----------------------------------------------------------------------------
# Pure-JAX reference (for a sanity check)
# ----------------------------------------------------------------------------
def reference_forward(x_btd, params):
    h = jnp.transpose(x_btd, (1, 0, 2))  # (T, B, D)
    for (w_ih, w_hh, b_ih, b_hh) in params["rnn"]:
        T, B, _ = h.shape
        H = w_ih.shape[0]
        ht = jnp.zeros((B, H), jnp.float32)
        outs = []
        for t in range(T):
            ht = jnp.tanh(h[t] @ w_ih.T + b_ih + ht @ w_hh.T + b_hh)
            outs.append(ht)
        h = jnp.stack(outs, axis=0)
    y = h @ params["fc_w"] + params["fc_b"]          # (T, B, O)
    return jnp.transpose(y, (1, 0, 2))               # (B, T, O)


# ----------------------------------------------------------------------------
# Main
# ----------------------------------------------------------------------------
if __name__ == "__main__":
    # Module constants from the PyTorch script
    encode_length = 0
    in_size = 25
    num_classes = 3
    out_size = in_size * num_classes  # 75

    # Small shapes consistent with the module
    num_layers = 2
    hidden_size = 32
    input_size = in_size  # 25
    batch = 2
    seq = 8

    key = jax.random.PRNGKey(0)
    keys = jax.random.split(key, 4 * num_layers + 3)
    k_iter = iter(keys)

    # PyTorch-style uniform(-1/sqrt(H), 1/sqrt(H)) init, deterministic
    bound = 1.0 / np.sqrt(hidden_size)

    def uni(k, shape):
        return jax.random.uniform(k, shape, jnp.float32, -bound, bound)

    rnn_params = []
    for layer in range(num_layers):
        d_in = input_size if layer == 0 else hidden_size
        w_ih = uni(next(k_iter), (hidden_size, d_in))
        w_hh = uni(next(k_iter), (hidden_size, hidden_size))
        b_ih = uni(next(k_iter), (hidden_size,))
        b_hh = uni(next(k_iter), (hidden_size,))
        rnn_params.append((w_ih, w_hh, b_ih, b_hh))

    fc_w = uni(next(k_iter), (hidden_size, out_size))       # stored as (H, O) = W^T
    fc_b = uni(next(k_iter), (1, out_size))

    params = {"rnn": rnn_params, "fc_w": fc_w, "fc_b": fc_b}

    x = jax.random.normal(next(k_iter), (batch, seq, input_size), jnp.float32)

    y = rnn_model_forward(x, params)
    y = jax.block_until_ready(y)

    y_ref = reference_forward(x, params)
    assert y.shape == (batch, seq, out_size), y.shape
    np.testing.assert_allclose(np.asarray(y), np.asarray(y_ref), rtol=1e-5, atol=1e-5)

    print("KERNEL_OK")
</pallas_src>

<mosaic_0001>
module attributes {stable_mosaic.version = 11 : i64} {
  func.func @_fused_rnn_kernel(%arg0: memref<16x25xf32, #tpu.memory_space<vmem>>, %arg1: memref<25x32xf32, #tpu.memory_space<vmem>>, %arg2: memref<32x32xf32, #tpu.memory_space<vmem>>, %arg3: memref<1x32xf32, #tpu.memory_space<vmem>>, %arg4: memref<32x32xf32, #tpu.memory_space<vmem>>, %arg5: memref<32x32xf32, #tpu.memory_space<vmem>>, %arg6: memref<1x32xf32, #tpu.memory_space<vmem>>, %arg7: memref<32x75xf32, #tpu.memory_space<vmem>>, %arg8: memref<1x75xf32, #tpu.memory_space<vmem>>, %arg9: memref<16x75xf32, #tpu.memory_space<vmem>>, %arg10: memref<16x32xf32, #tpu.memory_space<vmem>>, %arg11: memref<16x32xf32, #tpu.memory_space<vmem>>) attributes {dimension_semantics = [], scalar_prefetch = 0 : i64, scratch_operands = 2 : i64, tpu.core_type = #tpu.core_type<tc>} {
    %cst = arith.constant 0.000000e+00 : f32
    %0 = vector.broadcast %cst : f32 to vector<2x32xf32>
    %c0 = arith.constant 0 : index
    %c0_0 = arith.constant 0 : index
    %1 = vector.load %arg0[%c0, %c0_0] : memref<16x25xf32, #tpu.memory_space<vmem>>, vector<16x25xf32>
    %c0_1 = arith.constant 0 : index
    %c0_2 = arith.constant 0 : index
    %2 = vector.load %arg1[%c0_1, %c0_2] : memref<25x32xf32, #tpu.memory_space<vmem>>, vector<25x32xf32>
    %cst_3 = arith.constant dense<0.000000e+00> : vector<16x32xf32>
    %3 = tpu.matmul %1, %2, %cst_3 {dimension_numbers = #tpu.dot_dimension_numbers<[1], [0], [0], [1], [0, 0, 1, 1], [], []>} : vector<16x25xf32>, vector<25x32xf32>, vector<16x32xf32> -> vector<16x32xf32>
    %c0_4 = arith.constant 0 : index
    %c0_5 = arith.constant 0 : index
    %4 = vector.load %arg3[%c0_4, %c0_5] : memref<1x32xf32, #tpu.memory_space<vmem>>, vector<1x32xf32>
    %5 = vector.broadcast %4 : vector<1x32xf32> to vector<16x32xf32>
    %6 = arith.addf %3, %5 : vector<16x32xf32>
    %c0_6 = arith.constant 0 : index
    %c0_7 = arith.constant 0 : index
    %7 = vector.load %arg10[%c0_6, %c0_7] : memref<16x32xf32, #tpu.memory_space<vmem>>, vector<16x32xf32>
    tpu.vector_store %arg10[%c0_6, %c0_7], %6 {strides = array<i32>} : memref<16x32xf32, #tpu.memory_space<vmem>>, vector<16x32xf32>,
    %c0_8 = arith.constant 0 : index
    %c0_9 = arith.constant 0 : index
    %8 = vector.load %arg2[%c0_8, %c0_9] : memref<32x32xf32, #tpu.memory_space<vmem>>, vector<32x32xf32>
    %c0_i32 = arith.constant 0 : i32
    %c2_i32 = arith.constant 2 : i32
    %9 = arith.muli %c0_i32, %c2_i32 : i32
    %10 = arith.index_cast %9 : i32 to index
    %c0_10 = arith.constant 0 : index
    %11 = vector.load %arg10[%10, %c0_10] : memref<16x32xf32, #tpu.memory_space<vmem>>, vector<2x32xf32>
    %cst_11 = arith.constant dense<0.000000e+00> : vector<2x32xf32>
    %12 = tpu.matmul %0, %8, %cst_11 {dimension_numbers = #tpu.dot_dimension_numbers<[1], [0], [0], [1], [0, 0, 1, 1], [], []>} : vector<2x32xf32>, vector<32x32xf32>, vector<2x32xf32> -> vector<2x32xf32>
    %13 = arith.addf %11, %12 : vector<2x32xf32>
    %14 = math.tanh %13 : vector<2x32xf32>
    %15 = arith.index_cast %9 : i32 to index
    %c0_12 = arith.constant 0 : index
    %16 = vector.load %arg11[%15, %c0_12] : memref<16x32xf32, #tpu.memory_space<vmem>>, vector<2x32xf32>
    tpu.vector_store %arg11[%15, %c0_12], %14 {strides = array<i32>} : memref<16x32xf32, #tpu.memory_space<vmem>>, vector<2x32xf32>,
    %c1_i32 = arith.constant 1 : i32
    %c2_i32_13 = arith.constant 2 : i32
    %17 = arith.muli %c1_i32, %c2_i32_13 : i32
    %18 = arith.index_cast %17 : i32 to index
    %c0_14 = arith.constant 0 : index
    %19 = vector.load %arg10[%18, %c0_14] : memref<16x32xf32, #tpu.memory_space<vmem>>, vector<2x32xf32>
    %cst_15 = arith.constant dense<0.000000e+00> : vector<2x32xf32>
    %20 = tpu.matmul %14, %8, %cst_15 {dimension_numbers = #tpu.dot_dimension_numbers<[1], [0], [0], [1], [0, 0, 1, 1], [], []>} : vector<2x32xf32>, vector<32x32xf32>, vector<2x32xf32> -> vector<2x32xf32>
    %21 = arith.addf %19, %20 : vector<2x32xf32>
    %22 = math.tanh %21 : vector<2x32xf32>
    %23 = arith.index_cast %17 : i32 to index
    %c0_16 = arith.constant 0 : index
    %24 = vector.load %arg11[%23, %c0_16] : memref<16x32xf32, #tpu.memory_space<vmem>>, vector<2x32xf32>
    tpu.vector_store %arg11[%23, %c0_16], %22 {strides = array<i32>} : memref<16x32xf32, #tpu.memory_space<vmem>>, vector<2x32xf32>,
    %c2_i32_17 = arith.constant 2 : i32
    %c2_i32_18 = arith.constant 2 : i32
    %25 = arith.muli %c2_i32_17, %c2_i32_18 : i32
    %26 = arith.index_cast %25 : i32 to index
    %c0_19 = arith.constant 0 : index
    %27 = vector.load %arg10[%26, %c0_19] : memref<16x32xf32, #tpu.memory_space<vmem>>, vector<2x32xf32>
    %cst_20 = arith.constant dense<0.000000e+00> : vector<2x32xf32>
    %28 = tpu.matmul %22, %8, %cst_20 {dimension_numbers = #tpu.dot_dimension_numbers<[1], [0], [0], [1], [0, 0, 1, 1], [], []>} : vector<2x32xf32>, vector<32x32xf32>, vector<2x32xf32> -> vector<2x32xf32>
    %29 = arith.addf %27, %28 : vector<2x32xf32>
    %30 = math.tanh %29 : vector<2x32xf32>
    %31 = arith.index_cast %25 : i32 to index
    %c0_21 = arith.constant 0 : index
    %32 = vector.load %arg11[%31, %c0_21] : memref<16x32xf32, #tpu.memory_space<vmem>>, vector<2x32xf32>
    tpu.vector_store %arg11[%31, %c0_21], %30 {strides = array<i32>} : memref<16x32xf32, #tpu.memory_space<vmem>>, vector<2x32xf32>,
    %c3_i32 = arith.constant 3 : i32
    %c2_i32_22 = arith.constant 2 : i32
    %33 = arith.muli %c3_i32, %c2_i32_22 : i32
    %34 = arith.index_cast %33 : i32 to index
    %c0_23 = arith.constant 0 : index
    %35 = vector.load %arg10[%34, %c0_23] : memref<16x32xf32, #tpu.memory_space<vmem>>, vector<2x32xf32>
    %cst_24 = arith.constant dense<0.000000e+00> : vector<2x32xf32>
    %36 = tpu.matmul %30, %8, %cst_24 {dimension_numbers = #tpu.dot_dimension_numbers<[1], [0], [0], [1], [0, 0, 1, 1], [], []>} : vector<2x32xf32>, vector<32x32xf32>, vector<2x32xf32> -> vector<2x32xf32>
    %37 = arith.addf %35, %36 : vector<2x32xf32>
    %38 = math.tanh %37 : vector<2x32xf32>
    %39 = arith.index_cast %33 : i32 to index
    %c0_25 = arith.constant 0 : index
    %40 = vector.load %arg11[%39, %c0_25] : memref<16x32xf32, #tpu.memory_space<vmem>>, vector<2x32xf32>
    tpu.vector_store %arg11[%39, %c0_25], %38 {strides = array<i32>} : memref<16x32xf32, #tpu.memory_space<vmem>>, vector<2x32xf32>,
    %c4_i32 = arith.constant 4 : i32
    %c2_i32_26 = arith.constant 2 : i32
    %41 = arith.muli %c4_i32, %c2_i32_26 : i32
    %42 = arith.index_cast %41 : i32 to index
    %c0_27 = arith.constant 0 : index
    %43 = vector.load %arg10[%42, %c0_27] : memref<16x32xf32, #tpu.memory_space<vmem>>, vector<2x32xf32>
    %cst_28 = arith.constant dense<0.000000e+00> : vector<2x32xf32>
    %44 = tpu.matmul %38, %8, %cst_28 {dimension_numbers = #tpu.dot_dimension_numbers<[1], [0], [0], [1], [0, 0, 1, 1], [], []>} : vector<2x32xf32>, vector<32x32xf32>, vector<2x32xf32> -> vector<2x32xf32>
    %45 = arith.addf %43, %44 : vector<2x32xf32>
    %46 = math.tanh %45 : vector<2x32xf32>
    %47 = arith.index_cast %41 : i32 to index
    %c0_29 = arith.constant 0 : index
    %48 = vector.load %arg11[%47, %c0_29] : memref<16x32xf32, #tpu.memory_space<vmem>>, vector<2x32xf32>
    tpu.vector_store %arg11[%47, %c0_29], %46 {strides = array<i32>} : memref<16x32xf32, #tpu.memory_space<vmem>>, vector<2x32xf32>,
    %c5_i32 = arith.constant 5 : i32
    %c2_i32_30 = arith.constant 2 : i32
    %49 = arith.muli %c5_i32, %c2_i32_30 : i32
    %50 = arith.index_cast %49 : i32 to index
    %c0_31 = arith.constant 0 : index
    %51 = vector.load %arg10[%50, %c0_31] : memref<16x32xf32, #tpu.memory_space<vmem>>, vector<2x32xf32>
    %cst_32 = arith.constant dense<0.000000e+00> : vector<2x32xf32>
    %52 = tpu.matmul %46, %8, %cst_32 {dimension_numbers = #tpu.dot_dimension_numbers<[1], [0], [0], [1], [0, 0, 1, 1], [], []>} : vector<2x32xf32>, vector<32x32xf32>, vector<2x32xf32> -> vector<2x32xf32>
    %53 = arith.addf %51, %52 : vector<2x32xf32>
    %54 = math.tanh %53 : vector<2x32xf32>
    %55 = arith.index_cast %49 : i32 to index
    %c0_33 = arith.constant 0 : index
    %56 = vector.load %arg11[%55, %c0_33] : memref<16x32xf32, #tpu.memory_space<vmem>>, vector<2x32xf32>
    tpu.vector_store %arg11[%55, %c0_33], %54 {strides = array<i32>} : memref<16x32xf32, #tpu.memory_space<vmem>>, vector<2x32xf32>,
    %c6_i32 = arith.constant 6 : i32
    %c2_i32_34 = arith.constant 2 : i32
    %57 = arith.muli %c6_i32, %c2_i32_34 : i32
    %58 = arith.index_cast %57 : i32 to index
    %c0_35 = arith.constant 0 : index
    %59 = vector.load %arg10[%58, %c0_35] : memref<16x32xf32, #tpu.memory_space<vmem>>, vector<2x32xf32>
    %cst_36 = arith.constant dense<0.000000e+00> : vector<2x32xf32>
    %60 = tpu.matmul %54, %8, %cst_36 {dimension_numbers = #tpu.dot_dimension_numbers<[1], [0], [0], [1], [0, 0, 1, 1], [], []>} : vector<2x32xf32>, vector<32x32xf32>, vector<2x32xf32> -> vector<2x32xf32>
    %61 = arith.addf %59, %60 : vector<2x32xf32>
    %62 = math.tanh %61 : vector<2x32xf32>
    %63 = arith.index_cast %57 : i32 to index
    %c0_37 = arith.constant 0 : index
    %64 = vector.load %arg11[%63, %c0_37] : memref<16x32xf32, #tpu.memory_space<vmem>>, vector<2x32xf32>
    tpu.vector_store %arg11[%63, %c0_37], %62 {strides = array<i32>} : memref<16x32xf32, #tpu.memory_space<vmem>>, vector<2x32xf32>,
    %c7_i32 = arith.constant 7 : i32
    %c2_i32_38 = arith.constant 2 : i32
    %65 = arith.muli %c7_i32, %c2_i32_38 : i32
    %66 = arith.index_cast %65 : i32 to index
    %c0_39 = arith.constant 0 : index
    %67 = vector.load %arg10[%66, %c0_39] : memref<16x32xf32, #tpu.memory_space<vmem>>, vector<2x32xf32>
    %cst_40 = arith.constant dense<0.000000e+00> : vector<2x32xf32>
    %68 = tpu.matmul %62, %8, %cst_40 {dimension_numbers = #tpu.dot_dimension_numbers<[1], [0], [0], [1], [0, 0, 1, 1], [], []>} : vector<2x32xf32>, vector<32x32xf32>, vector<2x32xf32> -> vector<2x32xf32>
    %69 = arith.addf %67, %68 : vector<2x32xf32>
    %70 = math.tanh %69 : vector<2x32xf32>
    %71 = arith.index_cast %65 : i32 to index
    %c0_41 = arith.constant 0 : index
    %72 = vector.load %arg11[%71, %c0_41] : memref<16x32xf32, #tpu.memory_space<vmem>>, vector<2x32xf32>
    tpu.vector_store %arg11[%71, %c0_41], %70 {strides = array<i32>} : memref<16x32xf32, #tpu.memory_space<vmem>>, vector<2x32xf32>,
    %c8_i32 = arith.constant 8 : i32
    %c0_42 = arith.constant 0 : index
    %c0_43 = arith.constant 0 : index
    %73 = vector.load %arg11[%c0_42, %c0_43] : memref<16x32xf32, #tpu.memory_space<vmem>>, vector<16x32xf32>
    %c0_44 = arith.constant 0 : index
    %c0_45 = arith.constant 0 : index
    %74 = vector.load %arg4[%c0_44, %c0_45] : memref<32x32xf32, #tpu.memory_space<vmem>>, vector<32x32xf32>
    %cst_46 = arith.constant dense<0.000000e+00> : vector<16x32xf32>
    %75 = tpu.matmul %73, %74, %cst_46 {dimension_numbers = #tpu.dot_dimension_numbers<[1], [0], [0], [1], [0, 0, 1, 1], [], []>} : vector<16x32xf32>, vector<32x32xf32>, vector<16x32xf32> -> vector<16x32xf32>
    %c0_47 = arith.constant 0 : index
    %c0_48 = arith.constant 0 : index
    %76 = vector.load %arg6[%c0_47, %c0_48] : memref<1x32xf32, #tpu.memory_space<vmem>>, vector<1x32xf32>
    %77 = vector.broadcast %76 : vector<1x32xf32> to vector<16x32xf32>
    %78 = arith.addf %75, %77 : vector<16x32xf32>
    %c0_49 = arith.constant 0 : index
    %c0_50 = arith.constant 0 : index
    %79 = vector.load %arg10[%c0_49, %c0_50] : memref<16x32xf32, #tpu.memory_space<vmem>>, vector<16x32xf32>
    tpu.vector_store %arg10[%c0_49, %c0_50], %78 {strides = array<i32>} : memref<16x32xf32, #tpu.memory_space<vmem>>, vector<16x32xf32>,
    %c0_51 = arith.constant 0 : index
    %c0_52 = arith.constant 0 : index
    %80 = vector.load %arg5[%c0_51, %c0_52] : memref<32x32xf32, #tpu.memory_space<vmem>>, vector<32x32xf32>
    %c0_i32_53 = arith.constant 0 : i32
    %c2_i32_54 = arith.constant 2 : i32
    %81 = arith.muli %c0_i32_53, %c2_i32_54 : i32
    %82 = arith.index_cast %81 : i32 to index
    %c0_55 = arith.constant 0 : index
    %83 = vector.load %arg10[%82, %c0_55] : memref<16x32xf32, #tpu.memory_space<vmem>>, vector<2x32xf32>
    %cst_56 = arith.constant dense<0.000000e+00> : vector<2x32xf32>
    %84 = tpu.matmul %0, %80, %cst_56 {dimension_numbers = #tpu.dot_dimension_numbers<[1], [0], [0], [1], [0, 0, 1, 1], [], []>} : vector<2x32xf32>, vector<32x32xf32>, vector<2x32xf32> -> vector<2x32xf32>
    %85 = arith.addf %83, %84 : vector<2x32xf32>
    %86 = math.tanh %85 : vector<2x32xf32>
    %87 = arith.index_cast %81 : i32 to index
    %c0_57 = arith.constant 0 : index
    %88 = vector.load %arg11[%87, %c0_57] : memref<16x32xf32, #tpu.memory_space<vmem>>, vector<2x32xf32>
    tpu.vector_store %arg11[%87, %c0_57], %86 {strides = array<i32>} : memref<16x32xf32, #tpu.memory_space<vmem>>, vector<2x32xf32>,
    %c1_i32_58 = arith.constant 1 : i32
    %c2_i32_59 = arith.constant 2 : i32
    %89 = arith.muli %c1_i32_58, %c2_i32_59 : i32
    %90 = arith.index_cast %89 : i32 to index
    %c0_60 = arith.constant 0 : index
    %91 = vector.load %arg10[%90, %c0_60] : memref<16x32xf32, #tpu.memory_space<vmem>>, vector<2x32xf32>
    %cst_61 = arith.constant dense<0.000000e+00> : vector<2x32xf32>
    %92 = tpu.matmul %86, %80, %cst_61 {dimension_numbers = #tpu.dot_dimension_numbers<[1], [0], [0], [1], [0, 0, 1, 1], [], []>} : vector<2x32xf32>, vector<32x32xf32>, vector<2x32xf32> -> vector<2x32xf32>
    %93 = arith.addf %91, %92 : vector<2x32xf32>
    %94 = math.tanh %93 : vector<2x32xf32>
    %95 = arith.index_cast %89 : i32 to index
    %c0_62 = arith.constant 0 : index
    %96 = vector.load %arg11[%95, %c0_62] : memref<16x32xf32, #tpu.memory_space<vmem>>, vector<2x32xf32>
    tpu.vector_store %arg11[%95, %c0_62], %94 {strides = array<i32>} : memref<16x32xf32, #tpu.memory_space<vmem>>, vector<2x32xf32>,
    %c2_i32_63 = arith.constant 2 : i32
    %c2_i32_64 = arith.constant 2 : i32
    %97 = arith.muli %c2_i32_63, %c2_i32_64 : i32
    %98 = arith.index_cast %97 : i32 to index
    %c0_65 = arith.constant 0 : index
    %99 = vector.load %arg10[%98, %c0_65] : memref<16x32xf32, #tpu.memory_space<vmem>>, vector<2x32xf32>
    %cst_66 = arith.constant dense<0.000000e+00> : vector<2x32xf32>
    %100 = tpu.matmul %94, %80, %cst_66 {dimension_numbers = #tpu.dot_dimension_numbers<[1], [0], [0], [1], [0, 0, 1, 1], [], []>} : vector<2x32xf32>, vector<32x32xf32>, vector<2x32xf32> -> vector<2x32xf32>
    %101 = arith.addf %99, %100 : vector<2x32xf32>
    %102 = math.tanh %101 : vector<2x32xf32>
    %103 = arith.index_cast %97 : i32 to index
    %c0_67 = arith.constant 0 : index
    %104 = vector.load %arg11[%103, %c0_67] : memref<16x32xf32, #tpu.memory_space<vmem>>, vector<2x32xf32>
    tpu.vector_store %arg11[%103, %c0_67], %102 {strides = array<i32>} : memref<16x32xf32, #tpu.memory_space<vmem>>, vector<2x32xf32>,
    %c3_i32_68 = arith.constant 3 : i32
    %c2_i32_69 = arith.constant 2 : i32
    %105 = arith.muli %c3_i32_68, %c2_i32_69 : i32
    %106 = arith.index_cast %105 : i32 to index
    %c0_70 = arith.constant 0 : index
    %107 = vector.load %arg10[%106, %c0_70] : memref<16x32xf32, #tpu.memory_space<vmem>>, vector<2x32xf32>
    %cst_71 = arith.constant dense<0.000000e+00> : vector<2x32xf32>
    %108 = tpu.matmul %102, %80, %cst_71 {dimension_numbers = #tpu.dot_dimension_numbers<[1], [0], [0], [1], [0, 0, 1, 1], [], []>} : vector<2x32xf32>, vector<32x32xf32>, vector<2x32xf32> -> vector<2x32xf32>
    %109 = arith.addf %107, %108 : vector<2x32xf32>
    %110 = math.tanh %109 : vector<2x32xf32>
    %111 = arith.index_cast %105 : i32 to index
    %c0_72 = arith.constant 0 : index
    %112 = vector.load %arg11[%111, %c0_72] : memref<16x32xf32, #tpu.memory_space<vmem>>, vector<2x32xf32>
    tpu.vector_store %arg11[%111, %c0_72], %110 {strides = array<i32>} : memref<16x32xf32, #tpu.memory_space<vmem>>, vector<2x32xf32>,
    %c4_i32_73 = arith.constant 4 : i32
    %c2_i32_74 = arith.constant 2 : i32
    %113 = arith.muli %c4_i32_73, %c2_i32_74 : i32
    %114 = arith.index_cast %113 : i32 to index
    %c0_75 = arith.constant 0 : index
    %115 = vector.load %arg10[%114, %c0_75] : memref<16x32xf32, #tpu.memory_space<vmem>>, vector<2x32xf32>
    %cst_76 = arith.constant dense<0.000000e+00> : vector<2x32xf32>
    %116 = tpu.matmul %110, %80, %cst_76 {dimension_numbers = #tpu.dot_dimension_numbers<[1], [0], [0], [1], [0, 0, 1, 1], [], []>} : vector<2x32xf32>, vector<32x32xf32>, vector<2x32xf32> -> vector<2x32xf32>
    %117 = arith.addf %115, %116 : vector<2x32xf32>
    %118 = math.tanh %117 : vector<2x32xf32>
    %119 = arith.index_cast %113 : i32 to index
    %c0_77 = arith.constant 0 : index
    %120 = vector.load %arg11[%119, %c0_77] : memref<16x32xf32, #tpu.memory_space<vmem>>, vector<2x32xf32>
    tpu.vector_store %arg11[%119, %c0_77], %118 {strides = array<i32>} : memref<16x32xf32, #tpu.memory_space<vmem>>, vector<2x32xf32>,
    %c5_i32_78 = arith.constant 5 : i32
    %c2_i32_79 = arith.constant 2 : i32
    %121 = arith.muli %c5_i32_78, %c2_i32_79 : i32
    %122 = arith.index_cast %121 : i32 to index
    %c0_80 = arith.constant 0 : index
    %123 = vector.load %arg10[%122, %c0_80] : memref<16x32xf32, #tpu.memory_space<vmem>>, vector<2x32xf32>
    %cst_81 = arith.constant dense<0.000000e+00> : vector<2x32xf32>
    %124 = tpu.matmul %118, %80, %cst_81 {dimension_numbers = #tpu.dot_dimension_numbers<[1], [0], [0], [1], [0, 0, 1, 1], [], []>} : vector<2x32xf32>, vector<32x32xf32>, vector<2x32xf32> -> vector<2x32xf32>
    %125 = arith.addf %123, %124 : vector<2x32xf32>
    %126 = math.tanh %125 : vector<2x32xf32>
    %127 = arith.index_cast %121 : i32 to index
    %c0_82 = arith.constant 0 : index
    %128 = vector.load %arg11[%127, %c0_82] : memref<16x32xf32, #tpu.memory_space<vmem>>, vector<2x32xf32>
    tpu.vector_store %arg11[%127, %c0_82], %126 {strides = array<i32>} : memref<16x32xf32, #tpu.memory_space<vmem>>, vector<2x32xf32>,
    %c6_i32_83 = arith.constant 6 : i32
    %c2_i32_84 = arith.constant 2 : i32
    %129 = arith.muli %c6_i32_83, %c2_i32_84 : i32
    %130 = arith.index_cast %129 : i32 to index
    %c0_85 = arith.constant 0 : index
    %131 = vector.load %arg10[%130, %c0_85] : memref<16x32xf32, #tpu.memory_space<vmem>>, vector<2x32xf32>
    %cst_86 = arith.constant dense<0.000000e+00> : vector<2x32xf32>
    %132 = tpu.matmul %126, %80, %cst_86 {dimension_numbers = #tpu.dot_dimension_numbers<[1], [0], [0], [1], [0, 0, 1, 1], [], []>} : vector<2x32xf32>, vector<32x32xf32>, vector<2x32xf32> -> vector<2x32xf32>
    %133 = arith.addf %131, %132 : vector<2x32xf32>
    %134 = math.tanh %133 : vector<2x32xf32>
    %135 = arith.index_cast %129 : i32 to index
    %c0_87 = arith.constant 0 : index
    %136 = vector.load %arg11[%135, %c0_87] : memref<16x32xf32, #tpu.memory_space<vmem>>, vector<2x32xf32>
    tpu.vector_store %arg11[%135, %c0_87], %134 {strides = array<i32>} : memref<16x32xf32, #tpu.memory_space<vmem>>, vector<2x32xf32>,
    %c7_i32_88 = arith.constant 7 : i32
    %c2_i32_89 = arith.constant 2 : i32
    %137 = arith.muli %c7_i32_88, %c2_i32_89 : i32
    %138 = arith.index_cast %137 : i32 to index
    %c0_90 = arith.constant 0 : index
    %139 = vector.load %arg10[%138, %c0_90] : memref<16x32xf32, #tpu.memory_space<vmem>>, vector<2x32xf32>
    %cst_91 = arith.constant dense<0.000000e+00> : vector<2x32xf32>
    %140 = tpu.matmul %134, %80, %cst_91 {dimension_numbers = #tpu.dot_dimension_numbers<[1], [0], [0], [1], [0, 0, 1, 1], [], []>} : vector<2x32xf32>, vector<32x32xf32>, vector<2x32xf32> -> vector<2x32xf32>
    %141 = arith.addf %139, %140 : vector<2x32xf32>
    %142 = math.tanh %141 : vector<2x32xf32>
    %143 = arith.index_cast %137 : i32 to index
    %c0_92 = arith.constant 0 : index
    %144 = vector.load %arg11[%143, %c0_92] : memref<16x32xf32, #tpu.memory_space<vmem>>, vector<2x32xf32>
    tpu.vector_store %arg11[%143, %c0_92], %142 {strides = array<i32>} : memref<16x32xf32, #tpu.memory_space<vmem>>, vector<2x32xf32>,
    %c8_i32_93 = arith.constant 8 : i32
    %c0_94 = arith.constant 0 : index
    %c0_95 = arith.constant 0 : index
    %145 = vector.load %arg11[%c0_94, %c0_95] : memref<16x32xf32, #tpu.memory_space<vmem>>, vector<16x32xf32>
    %c0_96 = arith.constant 0 : index
    %c0_97 = arith.constant 0 : index
    %146 = vector.load %arg7[%c0_96, %c0_97] : memref<32x75xf32, #tpu.memory_space<vmem>>, vector<32x75xf32>
    %cst_98 = arith.constant dense<0.000000e+00> : vector<16x75xf32>
    %147 = tpu.matmul %145, %146, %cst_98 {dimension_numbers = #tpu.dot_dimension_numbers<[1], [0], [0], [1], [0, 0, 1, 1], [], []>} : vector<16x32xf32>, vector<32x75xf32>, vector<16x75xf32> -> vector<16x75xf32>
    %c0_99 = arith.constant 0 : index
    %c0_100 = arith.constant 0 : index
    %148 = vector.load %arg8[%c0_99, %c0_100] : memref<1x75xf32, #tpu.memory_space<vmem>>, vector<1x75xf32>
    %149 = vector.broadcast %148 : vector<1x75xf32> to vector<16x75xf32>
    %150 = arith.addf %147, %149 : vector<16x75xf32>
    %c0_101 = arith.constant 0 : index
    %c0_102 = arith.constant 0 : index
    %151 = vector.load %arg9[%c0_101, %c0_102] : memref<16x75xf32, #tpu.memory_space<vmem>>, vector<16x75xf32>
    tpu.vector_store %arg9[%c0_101, %c0_102], %150 {strides = array<i32>} : memref<16x75xf32, #tpu.memory_space<vmem>>, vector<16x75xf32>,
    return
  }
}

</mosaic_0001>

<llo_original>
// kernel: rnn_model_forward.1
$region0: #{rnn_model_forward.1}
  #allocation0 [shape = 'u32[]', space=smem, size = 0x4, offset = 0x4, fixed_abs, tag = 'smem constant byte address 0x4 - core index']
  #allocation1 [shape = 'u32[72,128]{1,0:T(1,128)}', space=vmem, size = 0x9000, scoped, tag = 'internal scratch']
  #allocation2 [shape = 'f32[16,32]{1,0:T(8,128)}', space=vmem, size = 0x2000, scoped, tag = 'scratch operand']
  #allocation3 [shape = 'f32[16,32]{1,0:T(8,128)}', space=vmem, size = 0x2000, scoped, tag = 'scratch operand']
  %s0 = inlined_call_operand.vmem [shape: f32[16,25], index: 0, kind: input, shape index: {}]
  %s1 = inlined_call_operand.vmem [shape: f32[25,32], index: 1, kind: input, shape index: {}]
  %s2 = inlined_call_operand.vmem [shape: f32[32,32], index: 2, kind: input, shape index: {}]
  %s3 = inlined_call_operand.vmem [shape: f32[1,32], index: 3, kind: input, shape index: {}]
  %s4 = inlined_call_operand.vmem [shape: f32[32,32], index: 4, kind: input, shape index: {}]
  %s5 = inlined_call_operand.vmem [shape: f32[32,32], index: 5, kind: input, shape index: {}]
  %s6 = inlined_call_operand.vmem [shape: f32[1,32], index: 6, kind: input, shape index: {}]
  %s7 = inlined_call_operand.vmem [shape: f32[32,75], index: 7, kind: input, shape index: {}]
  %s8 = inlined_call_operand.vmem [shape: f32[1,75], index: 8, kind: input, shape index: {}]
  %s9 = inlined_call_operand.vmem [shape: f32[16,75], index: 9, kind: output, shape index: {}]
  %s10 = sld [smem:[#allocation0]]
  $region46: #{rnn_model_forward.1} parent=0
    _
  %s12 = ssub.s32 1, %s10
  %s13 = scalar_select 0, %s12, %s10
  // Predicated region
  $region2: #{rnn_model_forward.1} parent=0 // pred_check
    _
  $region3: #{rnn_model_forward.1} parent=0 // pred_check_branch
    %15 = sbr.rel (0) target = $region5
  $region4: #{rnn_model_forward.1} parent=0 // pred_region
    _
  $region5: #{rnn_model_forward.1} parent=0 // pred_fallthru
    _
  // Predicated region
  $region6: #{rnn_model_forward.1} parent=0 // pred_check
    _
  $region7: #{rnn_model_forward.1} parent=0 // pred_check_branch
    %17 = sbr.rel (0) target = $region9
  $region8: #{rnn_model_forward.1} parent=0 // pred_region
    _
  $region9: #{rnn_model_forward.1} parent=0 // pred_fallthru
    _
  // Predicated region
  $region10: #{rnn_model_forward.1} parent=0 // pred_check
    _
  $region11: #{rnn_model_forward.1} parent=0 // pred_check_branch
    %19 = sbr.rel (0) target = $region13
  $region12: #{rnn_model_forward.1} parent=0 // pred_region
    _
  $region13: #{rnn_model_forward.1} parent=0 // pred_fallthru
    _
  // Predicated region
  $region14: #{rnn_model_forward.1} parent=0 // pred_check
    _
  $region15: #{rnn_model_forward.1} parent=0 // pred_check_branch
    %21 = sbr.rel (0) target = $region17
  $region16: #{rnn_model_forward.1} parent=0 // pred_region
    _
  $region17: #{rnn_model_forward.1} parent=0 // pred_fallthru
    _
  // Predicated region
  $region18: #{rnn_model_forward.1} parent=0 // pred_check
    _
  $region19: #{rnn_model_forward.1} parent=0 // pred_check_branch
    %23 = sbr.rel (0) target = $region21
  $region20: #{rnn_model_forward.1} parent=0 // pred_region
    _
  $region21: #{rnn_model_forward.1} parent=0 // pred_fallthru
    _
  // Predicated region
  $region22: #{rnn_model_forward.1} parent=0 // pred_check
    _
  $region23: #{rnn_model_forward.1} parent=0 // pred_check_branch
    %25 = sbr.rel (0) target = $region25
  $region24: #{rnn_model_forward.1} parent=0 // pred_region
    _
  $region25: #{rnn_model_forward.1} parent=0 // pred_fallthru
    _
  // Predicated region
  $region26: #{rnn_model_forward.1} parent=0 // pred_check
    _
  $region27: #{rnn_model_forward.1} parent=0 // pred_check_branch
    %27 = sbr.rel (0) target = $region29
  $region28: #{rnn_model_forward.1} parent=0 // pred_region
    _
  $region29: #{rnn_model_forward.1} parent=0 // pred_fallthru
    _
  // Predicated region
  $region30: #{rnn_model_forward.1} parent=0 // pred_check
    _
  $region31: #{rnn_model_forward.1} parent=0 // pred_check_branch
    %29 = sbr.rel (0) target = $region33
  $region32: #{rnn_model_forward.1} parent=0 // pred_region
    _
  $region33: #{rnn_model_forward.1} parent=0 // pred_fallthru
    _
  // Predicated region
  $region34: #{rnn_model_forward.1} parent=0 // pred_check
    _
  $region35: #{rnn_model_forward.1} parent=0 // pred_check_branch
    %31 = sbr.rel (0) target = $region37
  $region36: #{rnn_model_forward.1} parent=0 // pred_region
    _
  $region37: #{rnn_model_forward.1} parent=0 // pred_fallthru
    _
  %v32 = vld [vmem:[%s0] sm:$0xff]
  %v33 = vld [vmem:[%s0 + $0x8] sm:$0xff]
  %v34 = vld [vmem:[%s1] sm:$0xff]
  %v35 = vld [vmem:[%s1 + $0x8] sm:$0xff]
  %v36 = vld [vmem:[%s1 + $0x10] sm:$0xff]
  %v37 = vld [vmem:[%s1 + $0x18] sm:$0x1]
  %v38 = vld [vmem:[%s3] sm:$0x1]
  %v40 = vperm.slane %v38, 0
  %vm42 = vcmask 203776
  %v44 = vsel %vm42, %v32, 0
  %v47 = vsel %vm42, %v33, 0
  %vm49 = vcmask 1040384
  %v51 = vsel %vm49, %v37, 0
  %53 = vmatpush.msra.mxu0 0.0
  %54 = vmatpush.msra.mxu0 0.0
  %55 = vmatpush.msra.mxu0 0.0
  %56 = vmatpush.msra.mxu0 0.0
  %57 = vmatpush.msra.mxu0 0.0
  %58 = vmatpush.msra.mxu0 0.0
  %59 = vmatpush.msra.mxu0 0.0
  %60 = vmatpush.msra.mxu0 0.0
  %61 = vmatpush.msra.mxu0 0.0
  %62 = vmatpush.msra.mxu0 0.0
  %63 = vmatpush.msra.mxu0 0.0
  %64 = vmatpush.msra.mxu0 0.0
  %65 = vmatpush.msra.mxu0 %v51
  %66 = vmatpush.msra.mxu0 %v36
  %67 = vmatpush.msra.mxu0 %v35
  %68 = vmatpush.msra.mxu0 %v34
  %69 = vmatmul.f32.gmra.mxu0 %v44
  %v70 = vpop.f32.mrf.mxu0
  %v71 = vadd.f32 %v40, %v70
  %72 = vmatmul.f32.gmra.mxu0 %v47
  %v73 = vpop.f32.mrf.mxu0
  %v74 = vadd.f32 %v40, %v73
  %75 = vdwg.mxu0
  %vm76 = vcmask 261120
  %77 = vst.msk [vmem:[#allocation2] sm:$0xff] %vm76, %v71
  %78 = vst.msk [vmem:[#allocation2 + $0x8] sm:$0xff] %vm76, %v74
  %v79 = vld [vmem:[%s2] sm:$0xff]
  %v80 = vld [vmem:[%s2 + $0x8] sm:$0xff]
  %v81 = vld [vmem:[%s2 + $0x10] sm:$0xff]
  %v82 = vld [vmem:[%s2 + $0x18] sm:$0xff]
  %v83 = vld [vmem:[#allocation2] sm:$0x3]
  %v85 = vsel %vm76, 0.0, 0
  %87 = vmatpush.msra.mxu0 0.0
  %88 = vmatpush.msra.mxu0 0.0
  %89 = vmatpush.msra.mxu0 0.0
  %90 = vmatpush.msra.mxu0 0.0
  %91 = vmatpush.msra.mxu0 0.0
  %92 = vmatpush.msra.mxu0 0.0
  %93 = vmatpush.msra.mxu0 0.0
  %94 = vmatpush.msra.mxu0 0.0
  %95 = vmatpush.msra.mxu0 0.0
  %96 = vmatpush.msra.mxu0 0.0
  %97 = vmatpush.msra.mxu0 0.0
  %98 = vmatpush.msra.mxu0 0.0
  %99 = vmatpush.msra.mxu0 %v82
  %100 = vmatpush.msra.mxu0 %v81
  %101 = vmatpush.msra.mxu0 %v80
  %102 = vmatpush.msra.mxu0 %v79
  %103 = vmatmul.f32.gmra.mxu0 %v85
  %v104 = vpop.f32.mrf.mxu0
  %v105 = vadd.f32 0.0, %v104
  %106 = vdwg.mxu0
  %v107 = vadd.f32 %v83, %v105
  %v108 = vtanh.pop %v107
  %vm109 = vcmask 254976
  %110 = vst.msk [vmem:[#allocation3] sm:$0x3] %vm109, %v108
  %v111 = vld [vmem:[#allocation2 + $0x2] sm:$0x3]
  %v113 = vsel %vm76, %v108, 0
  %115 = vmatpush.msra.mxu0 0.0
  %116 = vmatpush.msra.mxu0 0.0
  %117 = vmatpush.msra.mxu0 0.0
  %118 = vmatpush.msra.mxu0 0.0
  %119 = vmatpush.msra.mxu0 0.0
  %120 = vmatpush.msra.mxu0 0.0
  %121 = vmatpush.msra.mxu0 0.0
  %122 = vmatpush.msra.mxu0 0.0
  %123 = vmatpush.msra.mxu0 0.0
  %124 = vmatpush.msra.mxu0 0.0
  %125 = vmatpush.msra.mxu0 0.0
  %126 = vmatpush.msra.mxu0 0.0
  %127 = vmatpush.msra.mxu0 %v82
  %128 = vmatpush.msra.mxu0 %v81
  %129 = vmatpush.msra.mxu0 %v80
  %130 = vmatpush.msra.mxu0 %v79
  %131 = vmatmul.f32.gmra.mxu0 %v113
  %v132 = vpop.f32.mrf.mxu0
  %v133 = vadd.f32 0.0, %v132
  %134 = vdwg.mxu0
  %v135 = vadd.f32 %v111, %v133
  %v136 = vtanh.pop %v135
  %137 = vst.msk [vmem:[#allocation3 + $0x2] sm:$0x3] %vm109, %v136
  %v138 = vld [vmem:[#allocation2 + $0x4] sm:$0x3]
  %v140 = vsel %vm76, %v136, 0
  %142 = vmatpush.msra.mxu0 0.0
  %143 = vmatpush.msra.mxu0 0.0
  %144 = vmatpush.msra.mxu0 0.0
  %145 = vmatpush.msra.mxu0 0.0
  %146 = vmatpush.msra.mxu0 0.0
  %147 = vmatpush.msra.mxu0 0.0
  %148 = vmatpush.msra.mxu0 0.0
  %149 = vmatpush.msra.mxu0 0.0
  %150 = vmatpush.msra.mxu0 0.0
  %151 = vmatpush.msra.mxu0 0.0
  %152 = vmatpush.msra.mxu0 0.0
  %153 = vmatpush.msra.mxu0 0.0
  %154 = vmatpush.msra.mxu0 %v82
  %155 = vmatpush.msra.mxu0 %v81
  %156 = vmatpush.msra.mxu0 %v80
  %157 = vmatpush.msra.mxu0 %v79
  %158 = vmatmul.f32.gmra.mxu0 %v140
  %v159 = vpop.f32.mrf.mxu0
  %v160 = vadd.f32 0.0, %v159
  %161 = vdwg.mxu0
  %v162 = vadd.f32 %v138, %v160
  %v163 = vtanh.pop %v162
  %164 = vst.msk [vmem:[#allocation3 + $0x4] sm:$0x3] %vm109, %v163
  %v165 = vld [vmem:[#allocation2 + $0x6] sm:$0x3]
  %v167 = vsel %vm76, %v163, 0
  %169 = vmatpush.msra.mxu0 0.0
  %170 = vmatpush.msra.mxu0 0.0
  %171 = vmatpush.msra.mxu0 0.0
  %172 = vmatpush.msra.mxu0 0.0
  %173 = vmatpush.msra.mxu0 0.0
  %174 = vmatpush.msra.mxu0 0.0
  %175 = vmatpush.msra.mxu0 0.0
  %176 = vmatpush.msra.mxu0 0.0
  %177 = vmatpush.msra.mxu0 0.0
  %178 = vmatpush.msra.mxu0 0.0
  %179 = vmatpush.msra.mxu0 0.0
  %180 = vmatpush.msra.mxu0 0.0
  %181 = vmatpush.msra.mxu0 %v82
  %182 = vmatpush.msra.mxu0 %v81
  %183 = vmatpush.msra.mxu0 %v80
  %184 = vmatpush.msra.mxu0 %v79
  %185 = vmatmul.f32.gmra.mxu0 %v167
  %v186 = vpop.f32.mrf.mxu0
  %v187 = vadd.f32 0.0, %v186
  %188 = vdwg.mxu0
  %v189 = vadd.f32 %v165, %v187
  %v190 = vtanh.pop %v189
  %191 = vst.msk [vmem:[#allocation3 + $0x6] sm:$0x3] %vm109, %v190
  %v192 = vld [vmem:[#allocation2 + $0x8] sm:$0x3]
  %v194 = vsel %vm76, %v190, 0
  %196 = vmatpush.msra.mxu0 0.0
  %197 = vmatpush.msra.mxu0 0.0
  %198 = vmatpush.msra.mxu0 0.0
  %199 = vmatpush.msra.mxu0 0.0
  %200 = vmatpush.msra.mxu0 0.0
  %201 = vmatpush.msra.mxu0 0.0
  %202 = vmatpush.msra.mxu0 0.0
  %203 = vmatpush.msra.mxu0 0.0
  %204 = vmatpush.msra.mxu0 0.0
  %205 = vmatpush.msra.mxu0 0.0
  %206 = vmatpush.msra.mxu0 0.0
  %207 = vmatpush.msra.mxu0 0.0
  %208 = vmatpush.msra.mxu0 %v82
  %209 = vmatpush.msra.mxu0 %v81
  %210 = vmatpush.msra.mxu0 %v80
  %211 = vmatpush.msra.mxu0 %v79
  %212 = vmatmul.f32.gmra.mxu0 %v194
  %v213 = vpop.f32.mrf.mxu0
  %v214 = vadd.f32 0.0, %v213
  %215 = vdwg.mxu0
  %v216 = vadd.f32 %v192, %v214
  %v217 = vtanh.pop %v216
  %218 = vst.msk [vmem:[#allocation3 + $0x8] sm:$0x3] %vm109, %v217
  %v219 = vld [vmem:[#allocation2 + $0xa] sm:$0x3]
  %v221 = vsel %vm76, %v217, 0
  %223 = vmatpush.msra.mxu0 0.0
  %224 = vmatpush.msra.mxu0 0.0
  %225 = vmatpush.msra.mxu0 0.0
  %226 = vmatpush.msra.mxu0 0.0
  %227 = vmatpush.msra.mxu0 0.0
  %228 = vmatpush.msra.mxu0 0.0
  %229 = vmatpush.msra.mxu0 0.0
  %230 = vmatpush.msra.mxu0 0.0
  %231 = vmatpush.msra.mxu0 0.0
  %232 = vmatpush.msra.mxu0 0.0
  %233 = vmatpush.msra.mxu0 0.0
  %234 = vmatpush.msra.mxu0 0.0
  %235 = vmatpush.msra.mxu0 %v82
  %236 = vmatpush.msra.mxu0 %v81
  %237 = vmatpush.msra.mxu0 %v80
  %238 = vmatpush.msra.mxu0 %v79
  %239 = vmatmul.f32.gmra.mxu0 %v221
  %v240 = vpop.f32.mrf.mxu0
  %v241 = vadd.f32 0.0, %v240
  %242 = vdwg.mxu0
  %v243 = vadd.f32 %v219, %v241
  %v244 = vtanh.pop %v243
  %245 = vst.msk [vmem:[#allocation3 + $0xa] sm:$0x3] %vm109, %v244
  %v246 = vld [vmem:[#allocation2 + $0xc] sm:$0x3]
  %v248 = vsel %vm76, %v244, 0
  %250 = vmatpush.msra.mxu0 0.0
  %251 = vmatpush.msra.mxu0 0.0
  %252 = vmatpush.msra.mxu0 0.0
  %253 = vmatpush.msra.mxu0 0.0
  %254 = vmatpush.msra.mxu0 0.0
  %255 = vmatpush.msra.mxu0 0.0
  %256 = vmatpush.msra.mxu0 0.0
  %257 = vmatpush.msra.mxu0 0.0
  %258 = vmatpush.msra.mxu0 0.0
  %259 = vmatpush.msra.mxu0 0.0
  %260 = vmatpush.msra.mxu0 0.0
  %261 = vmatpush.msra.mxu0 0.0
  %262 = vmatpush.msra.mxu0 %v82
  %263 = vmatpush.msra.mxu0 %v81
  %264 = vmatpush.msra.mxu0 %v80
  %265 = vmatpush.msra.mxu0 %v79
  %266 = vmatmul.f32.gmra.mxu0 %v248
  %v267 = vpop.f32.mrf.mxu0
  %v268 = vadd.f32 0.0, %v267
  %269 = vdwg.mxu0
  %v270 = vadd.f32 %v246, %v268
  %v271 = vtanh.pop %v270
  %272 = vst.msk [vmem:[#allocation3 + $0xc] sm:$0x3] %vm109, %v271
  %v273 = vld [vmem:[#allocation2 + $0xe] sm:$0x3]
  %v275 = vsel %vm76, %v271, 0
  %277 = vmatpush.msra.mxu0 0.0
  %278 = vmatpush.msra.mxu0 0.0
  %279 = vmatpush.msra.mxu0 0.0
  %280 = vmatpush.msra.mxu0 0.0
  %281 = vmatpush.msra.mxu0 0.0
  %282 = vmatpush.msra.mxu0 0.0
  %283 = vmatpush.msra.mxu0 0.0
  %284 = vmatpush.msra.mxu0 0.0
  %285 = vmatpush.msra.mxu0 0.0
  %286 = vmatpush.msra.mxu0 0.0
  %287 = vmatpush.msra.mxu0 0.0
  %288 = vmatpush.msra.mxu0 0.0
  %289 = vmatpush.msra.mxu0 %v82
  %290 = vmatpush.msra.mxu0 %v81
  %291 = vmatpush.msra.mxu0 %v80
  %292 = vmatpush.msra.mxu0 %v79
  %293 = vmatmul.f32.gmra.mxu0 %v275
  %v294 = vpop.f32.mrf.mxu0
  %v295 = vadd.f32 0.0, %v294
  %296 = vdwg.mxu0
  %v297 = vadd.f32 %v273, %v295
  %v298 = vtanh.pop %v297
  %299 = vst.msk [vmem:[#allocation3 + $0xe] sm:$0x3] %vm109, %v298
  %v300 = vld [vmem:[#allocation3] sm:$0xff]
  %v301 = vld [vmem:[#allocation3 + $0x8] sm:$0xff]
  %v302 = vld [vmem:[%s4] sm:$0xff]
  %v303 = vld [vmem:[%s4 + $0x8] sm:$0xff]
  %v304 = vld [vmem:[%s4 + $0x10] sm:$0xff]
  %v305 = vld [vmem:[%s4 + $0x18] sm:$0xff]
  %v306 = vld [vmem:[%s6] sm:$0x1]
  %v308 = vperm.slane %v306, 0
  %v311 = vsel %vm76, %v300, 0
  %v314 = vsel %vm76, %v301, 0
  %316 = vmatpush.msra.mxu0 0.0
  %317 = vmatpush.msra.mxu0 0.0
  %318 = vmatpush.msra.mxu0 0.0
  %319 = vmatpush.msra.mxu0 0.0
  %320 = vmatpush.msra.mxu0 0.0
  %321 = vmatpush.msra.mxu0 0.0
  %322 = vmatpush.msra.mxu0 0.0
  %323 = vmatpush.msra.mxu0 0.0
  %324 = vmatpush.msra.mxu0 0.0
  %325 = vmatpush.msra.mxu0 0.0
  %326 = vmatpush.msra.mxu0 0.0
  %327 = vmatpush.msra.mxu0 0.0
  %328 = vmatpush.msra.mxu0 %v305
  %329 = vmatpush.msra.mxu0 %v304
  %330 = vmatpush.msra.mxu0 %v303
  %331 = vmatpush.msra.mxu0 %v302
  %332 = vmatmul.f32.gmra.mxu0 %v311
  %v333 = vpop.f32.mrf.mxu0
  %v334 = vadd.f32 %v308, %v333
  %335 = vmatmul.f32.gmra.mxu0 %v314
  %v336 = vpop.f32.mrf.mxu0
  %v337 = vadd.f32 %v308, %v336
  %338 = vdwg.mxu0
  %339 = vst.msk [vmem:[#allocation2] sm:$0xff] %vm76, %v334
  %340 = vst.msk [vmem:[#allocation2 + $0x8] sm:$0xff] %vm76, %v337
  %v341 = vld [vmem:[%s5] sm:$0xff]
  %v342 = vld [vmem:[%s5 + $0x8] sm:$0xff]
  %v343 = vld [vmem:[%s5 + $0x10] sm:$0xff]
  %v344 = vld [vmem:[%s5 + $0x18] sm:$0xff]
  %v345 = vld [vmem:[#allocation2] sm:$0x3]
  %346 = vmatpush.msra.mxu0 0.0
  %347 = vmatpush.msra.mxu0 0.0
  %348 = vmatpush.msra.mxu0 0.0
  %349 = vmatpush.msra.mxu0 0.0
  %350 = vmatpush.msra.mxu0 0.0
  %351 = vmatpush.msra.mxu0 0.0
  %352 = vmatpush.msra.mxu0 0.0
  %353 = vmatpush.msra.mxu0 0.0
  %354 = vmatpush.msra.mxu0 0.0
  %355 = vmatpush.msra.mxu0 0.0
  %356 = vmatpush.msra.mxu0 0.0
  %357 = vmatpush.msra.mxu0 0.0
  %358 = vmatpush.msra.mxu0 %v344
  %359 = vmatpush.msra.mxu0 %v343
  %360 = vmatpush.msra.mxu0 %v342
  %361 = vmatpush.msra.mxu0 %v341
  %362 = vmatmul.f32.gmra.mxu0 %v85
  %v363 = vpop.f32.mrf.mxu0
  %v364 = vadd.f32 0.0, %v363
  %365 = vdwg.mxu0
  %v366 = vadd.f32 %v345, %v364
  %v367 = vtanh.pop %v366
  %368 = vst.msk [vmem:[#allocation3] sm:$0x3] %vm109, %v367
  %v369 = vld [vmem:[#allocation2 + $0x2] sm:$0x3]
  %v371 = vsel %vm76, %v367, 0
  %373 = vmatpush.msra.mxu0 0.0
  %374 = vmatpush.msra.mxu0 0.0
  %375 = vmatpush.msra.mxu0 0.0
  %376 = vmatpush.msra.mxu0 0.0
  %377 = vmatpush.msra.mxu0 0.0
  %378 = vmatpush.msra.mxu0 0.0
  %379 = vmatpush.msra.mxu0 0.0
  %380 = vmatpush.msra.mxu0 0.0
  %381 = vmatpush.msra.mxu0 0.0
  %382 = vmatpush.msra.mxu0 0.0
  %383 = vmatpush.msra.mxu0 0.0
  %384 = vmatpush.msra.mxu0 0.0
  %385 = vmatpush.msra.mxu0 %v344
  %386 = vmatpush.msra.mxu0 %v343
  %387 = vmatpush.msra.mxu0 %v342
  %388 = vmatpush.msra.mxu0 %v341
  %389 = vmatmul.f32.gmra.mxu0 %v371
  %v390 = vpop.f32.mrf.mxu0
  %v391 = vadd.f32 0.0, %v390
  %392 = vdwg.mxu0
  %v393 = vadd.f32 %v369, %v391
  %v394 = vtanh.pop %v393
  %395 = vst.msk [vmem:[#allocation3 + $0x2] sm:$0x3] %vm109, %v394
  %v396 = vld [vmem:[#allocation2 + $0x4] sm:$0x3]
  %v398 = vsel %vm76, %v394, 0
  %400 = vmatpush.msra.mxu0 0.0
  %401 = vmatpush.msra.mxu0 0.0
  %402 = vmatpush.msra.mxu0 0.0
  %403 = vmatpush.msra.mxu0 0.0
  %404 = vmatpush.msra.mxu0 0.0
  %405 = vmatpush.msra.mxu0 0.0
  %406 = vmatpush.msra.mxu0 0.0
  %407 = vmatpush.msra.mxu0 0.0
  %408 = vmatpush.msra.mxu0 0.0
  %409 = vmatpush.msra.mxu0 0.0
  %410 = vmatpush.msra.mxu0 0.0
  %411 = vmatpush.msra.mxu0 0.0
  %412 = vmatpush.msra.mxu0 %v344
  %413 = vmatpush.msra.mxu0 %v343
  %414 = vmatpush.msra.mxu0 %v342
  %415 = vmatpush.msra.mxu0 %v341
  %416 = vmatmul.f32.gmra.mxu0 %v398
  %v417 = vpop.f32.mrf.mxu0
  %v418 = vadd.f32 0.0, %v417
  %419 = vdwg.mxu0
  %v420 = vadd.f32 %v396, %v418
  %v421 = vtanh.pop %v420
  %422 = vst.msk [vmem:[#allocation3 + $0x4] sm:$0x3] %vm109, %v421
  %v423 = vld [vmem:[#allocation2 + $0x6] sm:$0x3]
  %v425 = vsel %vm76, %v421, 0
  %427 = vmatpush.msra.mxu0 0.0
  %428 = vmatpush.msra.mxu0 0.0
  %429 = vmatpush.msra.mxu0 0.0
  %430 = vmatpush.msra.mxu0 0.0
  %431 = vmatpush.msra.mxu0 0.0
  %432 = vmatpush.msra.mxu0 0.0
  %433 = vmatpush.msra.mxu0 0.0
  %434 = vmatpush.msra.mxu0 0.0
  %435 = vmatpush.msra.mxu0 0.0
  %436 = vmatpush.msra.mxu0 0.0
  %437 = vmatpush.msra.mxu0 0.0
  %438 = vmatpush.msra.mxu0 0.0
  %439 = vmatpush.msra.mxu0 %v344
  %440 = vmatpush.msra.mxu0 %v343
  %441 = vmatpush.msra.mxu0 %v342
  %442 = vmatpush.msra.mxu0 %v341
  %443 = vmatmul.f32.gmra.mxu0 %v425
  %v444 = vpop.f32.mrf.mxu0
  %v445 = vadd.f32 0.0, %v444
  %446 = vdwg.mxu0
  %v447 = vadd.f32 %v423, %v445
  %v448 = vtanh.pop %v447
  %449 = vst.msk [vmem:[#allocation3 + $0x6] sm:$0x3] %vm109, %v448
  %v450 = vld [vmem:[#allocation2 + $0x8] sm:$0x3]
  %v452 = vsel %vm76, %v448, 0
  %454 = vmatpush.msra.mxu0 0.0
  %455 = vmatpush.msra.mxu0 0.0
  %456 = vmatpush.msra.mxu0 0.0
  %457 = vmatpush.msra.mxu0 0.0
  %458 = vmatpush.msra.mxu0 0.0
  %459 = vmatpush.msra.mxu0 0.0
  %460 = vmatpush.msra.mxu0 0.0
  %461 = vmatpush.msra.mxu0 0.0
  %462 = vmatpush.msra.mxu0 0.0
  %463 = vmatpush.msra.mxu0 0.0
  %464 = vmatpush.msra.mxu0 0.0
  %465 = vmatpush.msra.mxu0 0.0
  %466 = vmatpush.msra.mxu0 %v344
  %467 = vmatpush.msra.mxu0 %v343
  %468 = vmatpush.msra.mxu0 %v342
  %469 = vmatpush.msra.mxu0 %v341
  %470 = vmatmul.f32.gmra.mxu0 %v452
  %v471 = vpop.f32.mrf.mxu0
  %v472 = vadd.f32 0.0, %v471
  %473 = vdwg.mxu0
  %v474 = vadd.f32 %v450, %v472
  %v475 = vtanh.pop %v474
  %476 = vst.msk [vmem:[#allocation3 + $0x8] sm:$0x3] %vm109, %v475
  %v477 = vld [vmem:[#allocation2 + $0xa] sm:$0x3]
  %v479 = vsel %vm76, %v475, 0
  %481 = vmatpush.msra.mxu0 0.0
  %482 = vmatpush.msra.mxu0 0.0
  %483 = vmatpush.msra.mxu0 0.0
  %484 = vmatpush.msra.mxu0 0.0
  %485 = vmatpush.msra.mxu0 0.0
  %486 = vmatpush.msra.mxu0 0.0
  %487 = vmatpush.msra.mxu0 0.0
  %488 = vmatpush.msra.mxu0 0.0
  %489 = vmatpush.msra.mxu0 0.0
  %490 = vmatpush.msra.mxu0 0.0
  %491 = vmatpush.msra.mxu0 0.0
  %492 = vmatpush.msra.mxu0 0.0
  %493 = vmatpush.msra.mxu0 %v344
  %494 = vmatpush.msra.mxu0 %v343
  %495 = vmatpush.msra.mxu0 %v342
  %496 = vmatpush.msra.mxu0 %v341
  %497 = vmatmul.f32.gmra.mxu0 %v479
  %v498 = vpop.f32.mrf.mxu0
  %v499 = vadd.f32 0.0, %v498
  %500 = vdwg.mxu0
  %v501 = vadd.f32 %v477, %v499
  %v502 = vtanh.pop %v501
  %503 = vst.msk [vmem:[#allocation3 + $0xa] sm:$0x3] %vm109, %v502
  %v504 = vld [vmem:[#allocation2 + $0xc] sm:$0x3]
  %v506 = vsel %vm76, %v502, 0
  %508 = vmatpush.msra.mxu0 0.0
  %509 = vmatpush.msra.mxu0 0.0
  %510 = vmatpush.msra.mxu0 0.0
  %511 = vmatpush.msra.mxu0 0.0
  %512 = vmatpush.msra.mxu0 0.0
  %513 = vmatpush.msra.mxu0 0.0
  %514 = vmatpush.msra.mxu0 0.0
  %515 = vmatpush.msra.mxu0 0.0
  %516 = vmatpush.msra.mxu0 0.0
  %517 = vmatpush.msra.mxu0 0.0
  %518 = vmatpush.msra.mxu0 0.0
  %519 = vmatpush.msra.mxu0 0.0
  %520 = vmatpush.msra.mxu0 %v344
  %521 = vmatpush.msra.mxu0 %v343
  %522 = vmatpush.msra.mxu0 %v342
  %523 = vmatpush.msra.mxu0 %v341
  %524 = vmatmul.f32.gmra.mxu0 %v506
  %v525 = vpop.f32.mrf.mxu0
  %v526 = vadd.f32 0.0, %v525
  %527 = vdwg.mxu0
  %v528 = vadd.f32 %v504, %v526
  %v529 = vtanh.pop %v528
  %530 = vst.msk [vmem:[#allocation3 + $0xc] sm:$0x3] %vm109, %v529
  %v531 = vld [vmem:[#allocation2 + $0xe] sm:$0x3]
  %v533 = vsel %vm76, %v529, 0
  %535 = vmatpush.msra.mxu0 0.0
  %536 = vmatpush.msra.mxu0 0.0
  %537 = vmatpush.msra.mxu0 0.0
  %538 = vmatpush.msra.mxu0 0.0
  %539 = vmatpush.msra.mxu0 0.0
  %540 = vmatpush.msra.mxu0 0.0
  %541 = vmatpush.msra.mxu0 0.0
  %542 = vmatpush.msra.mxu0 0.0
  %543 = vmatpush.msra.mxu0 0.0
  %544 = vmatpush.msra.mxu0 0.0
  %545 = vmatpush.msra.mxu0 0.0
  %546 = vmatpush.msra.mxu0 0.0
  %547 = vmatpush.msra.mxu0 %v344
  %548 = vmatpush.msra.mxu0 %v343
  %549 = vmatpush.msra.mxu0 %v342
  %550 = vmatpush.msra.mxu0 %v341
  %551 = vmatmul.f32.gmra.mxu0 %v533
  %v552 = vpop.f32.mrf.mxu0
  %v553 = vadd.f32 0.0, %v552
  %554 = vdwg.mxu0
  %v555 = vadd.f32 %v531, %v553
  %v556 = vtanh.pop %v555
  %557 = vst.msk [vmem:[#allocation3 + $0xe] sm:$0x3] %vm109, %v556
  %v558 = vld [vmem:[#allocation3] sm:$0xff]
  %v559 = vld [vmem:[#allocation3 + $0x8] sm:$0xff]
  %v560 = vld [vmem:[%s7] sm:$0xff]
  %v561 = vld [vmem:[%s7 + $0x8] sm:$0xff]
  %v562 = vld [vmem:[%s7 + $0x10] sm:$0xff]
  %v563 = vld [vmem:[%s7 + $0x18] sm:$0xff]
  %v564 = vld [vmem:[%s8] sm:$0x1]
  %v566 = vperm.slane %v564, 0
  %v569 = vsel %vm76, %v558, 0
  %v572 = vsel %vm76, %v559, 0
  %574 = vmatpush.msra.mxu0 0.0
  %575 = vmatpush.msra.mxu0 0.0
  %576 = vmatpush.msra.mxu0 0.0
  %577 = vmatpush.msra.mxu0 0.0
  %578 = vmatpush.msra.mxu0 0.0
  %579 = vmatpush.msra.mxu0 0.0
  %580 = vmatpush.msra.mxu0 0.0
  %581 = vmatpush.msra.mxu0 0.0
  %582 = vmatpush.msra.mxu0 0.0
  %583 = vmatpush.msra.mxu0 0.0
  %584 = vmatpush.msra.mxu0 0.0
  %585 = vmatpush.msra.mxu0 0.0
  %586 = vmatpush.msra.mxu0 %v563
  %587 = vmatpush.msra.mxu0 %v562
  %588 = vmatpush.msra.mxu0 %v561
  %589 = vmatpush.msra.mxu0 %v560
  %590 = vmatmul.f32.gmra.mxu0 %v569
  %v591 = vpop.f32.mrf.mxu0
  %v592 = vadd.f32 %v566, %v591
  %593 = vmatmul.f32.gmra.mxu0 %v572
  %v594 = vpop.f32.mrf.mxu0
  %v595 = vadd.f32 %v566, %v594
  %596 = vdwg.mxu0
  %vm597 = vcmask 613376
  %598 = vst.msk [vmem:[%s9] sm:$0xff] %vm597, %v592
  %599 = vst.msk [vmem:[%s9 + $0x8] sm:$0xff] %vm597, %v595
  // Predicated region
  $region38: #{rnn_model_forward.1} parent=0 // pred_check
    _
  $region39: #{rnn_model_forward.1} parent=0 // pred_check_branch
    %601 = sbr.rel (0) target = $region41
  $region40: #{rnn_model_forward.1} parent=0 // pred_region
    _
  $region41: #{rnn_model_forward.1} parent=0 // pred_fallthru
    _
  // Predicated region
  $region42: #{rnn_model_forward.1} parent=0 // pred_check
    _
  $region43: #{rnn_model_forward.1} parent=0 // pred_check_branch
    %603 = sbr.rel (0) target = $region45
  $region44: #{rnn_model_forward.1} parent=0 // pred_region
    _
  $region45: #{rnn_model_forward.1} parent=0 // pred_fallthru
    _

</llo_original>
